<compile_context>
chip_gen: v7x
topology: tpu7x:2x2x1
jax: 0.10.0
libtpu: 0.0.40
codegen_flags: <defaults>
</compile_context>

<pallas_src>
import functools

import jax
import jax.numpy as jnp
from jax.experimental import pallas as pl
from jax.experimental.pallas import tpu as pltpu


def _round_up(x, m):
    return (x + m - 1) // m * m


def _cdiv(a, b):
    return (a + b - 1) // b


def _vmem_capacity_bytes():
    """Generation-aware VMEM capacity (per TensorCore); conservative fallback."""
    try:
        info = pltpu.get_tpu_info()
        cap = getattr(info, "vmem_capacity_bytes", None)
        if cap:
            return int(cap)
    except Exception:
        pass
    return 64 * 1024 * 1024  # safe on v5e/v6e/v7x


def _resident_spec(shape):
    """Grid-invariant operand (fetched once): single-buffer it to save VMEM."""
    idx = lambda i: (0,) * len(shape)
    try:
        return pl.BlockSpec(shape, idx, pipeline_mode=pl.Buffered(1))
    except (TypeError, AttributeError):
        # Older Pallas without pipeline_mode / Buffered: fall back to default.
        return pl.BlockSpec(shape, idx)


def _autoencoder_kernel(x_ref, wg_ref, bg_ref, wh_ref, bh_ref, o_ref):
    # x_ref:  (tb, nq_pad)      f32 batch tile (cast to compute dtype in-kernel)
    # wg_ref: (nq_pad, k_pad)   compute-dtype encoder weight (pre-transposed, zero-padded)
    # bg_ref: (1, k_pad)        f32 encoder bias (zero-padded)
    # wh_ref: (k_pad, nq_pad)   compute-dtype decoder weight (pre-transposed, zero-padded)
    # bh_ref: (1, nq_pad)       f32 decoder bias (zero-padded)
    # o_ref:  (tb, nq_pad)      output tile (bf16 by default)
    x = x_ref[...].astype(wg_ref.dtype)  # VPU cast; free under the DMA bottleneck

    # Encoder: MXU matmul with f32 accumulation, sigmoid on the EUP.
    code = jnp.dot(x, wg_ref[...], preferred_element_type=jnp.float32) + bg_ref[...]
    code = jax.nn.sigmoid(code)

    # Decoder: cast the activation back to the MXU-native dtype, accumulate f32.
    pre = jnp.dot(code.astype(wh_ref.dtype), wh_ref[...],
                  preferred_element_type=jnp.float32) + bh_ref[...]
    o_ref[...] = jax.nn.sigmoid(pre).astype(o_ref.dtype)


@functools.partial(jax.jit,
                   static_argnames=("block_batch", "compute_dtype", "out_dtype"))
def base_autoencoder_forward(x, wg_t, bg, wh_t, bh, *, block_batch=2048,
                             compute_dtype=jnp.bfloat16,
                             out_dtype=jnp.bfloat16):
    """x: (B, num_question) f32.  Returns (B, num_question) in out_dtype.

    Set compute_dtype=out_dtype=jnp.float32 for an exact-parity path.
    """
    B, nq = x.shape
    k = wg_t.shape[1]
    cbytes = jnp.dtype(compute_dtype).itemsize
    obytes = jnp.dtype(out_dtype).itemsize

    # ---- static tiling decisions (shapes are concrete under jit) -------------
    LANE = 128       # lane width
    SUBLANE = 16     # covers bf16 sublane packing (and f32's 8)
    nq_pad = _round_up(nq, LANE)
    k_pad = _round_up(k, LANE)

    # Batch tile: as large as requested (amortizes the ~0.35us/step pipeline
    # overhead and fills the MXU rows), but no bigger than the padded batch.
    bb = max(SUBLANE, min(block_batch, _round_up(B, SUBLANE)))
    bb = _round_up(bb, SUBLANE)

    # Keep the grid >= MIN_STEPS steps for nontrivial B so both TensorCores get
    # work on v7x (costs one extra ~0.35us step on single-TC v5e/v6e).
    MIN_STEPS = 2
    if B >= MIN_STEPS * SUBLANE:
        bb = min(bb, _round_up(_cdiv(B, MIN_STEPS), SUBLANE))

    # Generation-aware VMEM budget + matching compiler limit (per TensorCore).
    vmem_cap = _vmem_capacity_bytes()
    VMEM_BUDGET = (vmem_cap * 5) // 8                       # ~40 MiB v7x, ~80 MiB v5e/v6e
    vmem_limit = min((vmem_cap * 7) // 8, VMEM_BUDGET + (8 << 20))

    def _vmem_bytes(tb):
        x_b = 2 * tb * nq_pad * 4                 # double-buffered f32 input tile
        o_b = 2 * tb * nq_pad * obytes            # double-buffered output tile
        w_b = (2 * nq_pad * k_pad) * cbytes       # weights (single-buffered, Buffered(1))
        b_b = (k_pad + nq_pad) * 4                # biases
        mid = tb * nq_pad * cbytes                # in-kernel bf16 copy of x
        mid += tb * (k_pad + nq_pad) * 4          # code / pre-activation live values
        return x_b + o_b + w_b + b_b + mid

    while bb > SUBLANE and _vmem_bytes(bb) > VMEM_BUDGET:
        bb = _round_up(bb // 2, SUBLANE)

    B_pad = _round_up(B, bb)
    grid = (pl.cdiv(B_pad, bb),)

    # ---- operands: x stays f32 (pad only if misaligned); weights cast once ---
    if (B_pad, nq_pad) != (B, nq):
        xk = jnp.pad(x, ((0, B_pad - B), (0, nq_pad - nq)))
    else:
        xk = x
    wgc = jnp.pad(wg_t, ((0, nq_pad - nq), (0, k_pad - k))).astype(compute_dtype)
    whc = jnp.pad(wh_t, ((0, k_pad - k), (0, nq_pad - nq))).astype(compute_dtype)
    bgc = jnp.pad(bg.reshape(1, -1).astype(jnp.float32), ((0, 0), (0, k_pad - k)))
    bhc = jnp.pad(bh.reshape(1, -1).astype(jnp.float32), ((0, 0), (0, nq_pad - nq)))

    cost = pl.CostEstimate(
        flops=4 * B_pad * nq_pad * k_pad,                       # two matmuls
        transcendentals=2 * B_pad * (k_pad + nq_pad),           # sigmoid = exp + recip
        bytes_accessed=(B_pad * nq_pad * (4 + obytes)           # x in (f32), out
                        + 2 * nq_pad * k_pad * cbytes           # weights
                        + (k_pad + nq_pad) * 4),                # biases
    )

    out_pad = pl.pallas_call(
        _autoencoder_kernel,
        out_shape=jax.ShapeDtypeStruct((B_pad, nq_pad), out_dtype),
        grid_spec=pltpu.PrefetchScalarGridSpec(
            num_scalar_prefetch=0,
            grid=grid,
            in_specs=[
                pl.BlockSpec((bb, nq_pad), lambda i: (i, 0)),   # x tile (streamed)
                _resident_spec((nq_pad, k_pad)),                # Wg^T (grid-invariant)
                _resident_spec((1, k_pad)),                     # bg
                _resident_spec((k_pad, nq_pad)),                # Wh^T (grid-invariant)
                _resident_spec((1, nq_pad)),                    # bh
            ],
            out_specs=pl.BlockSpec((bb, nq_pad), lambda i: (i, 0)),
        ),
        compiler_params=pltpu.CompilerParams(
            dimension_semantics=("parallel",),   # batch axis shards across TCs (v7x)
            vmem_limit_bytes=vmem_limit,
        ),
        cost_estimate=cost,
    )(xk, wgc, bgc, whc, bhc)

    # Drop only the padding that was actually added (avoid a needless HBM pass).
    # NOTE: padded feature columns hold sigmoid(0)=0.5, so they must be sliced
    # off before handing the result to callers expecting (B, num_question).
    if B_pad == B and nq_pad == nq:
        return out_pad
    if nq_pad == nq:
        return out_pad[:B]
    return out_pad[:B, :nq]


def init_params(key, num_question, k):
    """Deterministic init matching nn.Linear's U(-1/sqrt(fan_in), 1/sqrt(fan_in))."""
    kg_w, kg_b, kh_w, kh_b = jax.random.split(key, 4)
    lim_g = 1.0 / jnp.sqrt(jnp.float32(num_question))
    lim_h = 1.0 / jnp.sqrt(jnp.float32(k))
    # PyTorch stores g.weight as (k, num_question); we build the transpose directly.
    wg_t = jax.random.uniform(kg_w, (num_question, k), jnp.float32, -lim_g, lim_g)
    bg = jax.random.uniform(kg_b, (k,), jnp.float32, -lim_g, lim_g)
    wh_t = jax.random.uniform(kh_w, (k, num_question), jnp.float32, -lim_h, lim_h)
    bh = jax.random.uniform(kh_b, (num_question,), jnp.float32, -lim_h, lim_h)
    return wg_t, bg, wh_t, bh


if __name__ == "__main__":
    # Small shapes consistent with the module (k=100 default); batch / nq / k are
    # deliberately NOT multiples of the tile sizes to exercise the padding path.
    B, NUM_QUESTION, K = 10, 200, 100

    key = jax.random.PRNGKey(0)
    key_x, key_p = jax.random.split(key)
    x = jax.random.uniform(key_x, (B, NUM_QUESTION), jnp.float32)

    wg_t, bg, wh_t, bh = init_params(key_p, NUM_QUESTION, K)

    out = base_autoencoder_forward(x, wg_t, bg, wh_t, bh)
    out = jax.block_until_ready(out)

    # Pure-JAX f32 reference of the forward semantics (kernel uses bf16 compute
    # and bf16 output with f32 accumulation, so allow bf16-level tolerance).
    code_ref = jax.nn.sigmoid(x @ wg_t + bg[None, :])
    out_ref = jax.nn.sigmoid(code_ref @ wh_t + bh[None, :])
    assert out.shape == (B, NUM_QUESTION)
    assert jnp.allclose(out.astype(jnp.float32), out_ref, atol=2e-2, rtol=2e-2), (
        float(jnp.max(jnp.abs(out.astype(jnp.float32) - out_ref))))

    print("KERNEL_OK")
</pallas_src>

<mosaic_0001>
module attributes {stable_mosaic.version = 11 : i64} {
  func.func @_autoencoder_kernel(%arg0: i32, %arg1: memref<16x256xf32, #tpu.memory_space<vmem>>, %arg2: memref<256x128xbf16, #tpu.memory_space<vmem>>, %arg3: memref<1x128xf32, #tpu.memory_space<vmem>>, %arg4: memref<128x256xbf16, #tpu.memory_space<vmem>>, %arg5: memref<1x256xf32, #tpu.memory_space<vmem>>, %arg6: memref<16x256xbf16, #tpu.memory_space<vmem>>) attributes {dimension_semantics = [#tpu.dimension_semantics<parallel>], iteration_bounds = array<i64: 1>, scalar_prefetch = 0 : i64, scratch_operands = 0 : i64, tpu.core_type = #tpu.core_type<tc>, window_params = [{transform_indices = @transform_0, window_bounds = array<i64: 16, 256>}, {pipeline_mode = #tpu.pipeline_mode<synchronous>, transform_indices = @transform_1, window_bounds = array<i64: 256, 128>}, {pipeline_mode = #tpu.pipeline_mode<synchronous>, transform_indices = @transform_2, window_bounds = array<i64: 1, 128>}, {pipeline_mode = #tpu.pipeline_mode<synchronous>, transform_indices = @transform_3, window_bounds = array<i64: 128, 256>}, {pipeline_mode = #tpu.pipeline_mode<synchronous>, transform_indices = @transform_4, window_bounds = array<i64: 1, 256>}, {transform_indices = @transform_5, window_bounds = array<i64: 16, 256>}]} {
    %c0 = arith.constant 0 : index
    %c0_0 = arith.constant 0 : index
    %0 = vector.load %arg1[%c0, %c0_0] : memref<16x256xf32, #tpu.memory_space<vmem>>, vector<16x256xf32>
    %1 = arith.truncf %0 : vector<16x256xf32> to vector<16x256xbf16>
    %c0_1 = arith.constant 0 : index
    %c0_2 = arith.constant 0 : index
    %2 = vector.load %arg2[%c0_1, %c0_2] : memref<256x128xbf16, #tpu.memory_space<vmem>>, vector<256x128xbf16>
    %cst = arith.constant dense<0.000000e+00> : vector<16x128xf32>
    %3 = tpu.matmul %1, %2, %cst {dimension_numbers = #tpu.dot_dimension_numbers<[1], [0], [0], [1], [0, 0, 1, 1], [], []>} : vector<16x256xbf16>, vector<256x128xbf16>, vector<16x128xf32> -> vector<16x128xf32>
    %c0_3 = arith.constant 0 : index
    %c0_4 = arith.constant 0 : index
    %4 = vector.load %arg3[%c0_3, %c0_4] : memref<1x128xf32, #tpu.memory_space<vmem>>, vector<1x128xf32>
    %5 = vector.broadcast %4 : vector<1x128xf32> to vector<16x128xf32>
    %6 = arith.addf %3, %5 : vector<16x128xf32>
    %7 = arith.negf %6 : vector<16x128xf32>
    %8 = math.exp %7 : vector<16x128xf32>
    %cst_5 = arith.constant 1.000000e+00 : f32
    %9 = vector.broadcast %cst_5 : f32 to vector<16x128xf32>
    %10 = arith.addf %9, %8 : vector<16x128xf32>
    %11 = arith.divf %9, %10 : vector<16x128xf32>
    %12 = arith.truncf %11 : vector<16x128xf32> to vector<16x128xbf16>
    %c0_6 = arith.constant 0 : index
    %c0_7 = arith.constant 0 : index
    %13 = vector.load %arg4[%c0_6, %c0_7] : memref<128x256xbf16, #tpu.memory_space<vmem>>, vector<128x256xbf16>
    %cst_8 = arith.constant dense<0.000000e+00> : vector<16x256xf32>
    %14 = tpu.matmul %12, %13, %cst_8 {dimension_numbers = #tpu.dot_dimension_numbers<[1], [0], [0], [1], [0, 0, 1, 1], [], []>} : vector<16x128xbf16>, vector<128x256xbf16>, vector<16x256xf32> -> vector<16x256xf32>
    %c0_9 = arith.constant 0 : index
    %c0_10 = arith.constant 0 : index
    %15 = vector.load %arg5[%c0_9, %c0_10] : memref<1x256xf32, #tpu.memory_space<vmem>>, vector<1x256xf32>
    %16 = vector.broadcast %15 : vector<1x256xf32> to vector<16x256xf32>
    %17 = arith.addf %14, %16 : vector<16x256xf32>
    %18 = arith.negf %17 : vector<16x256xf32>
    %19 = math.exp %18 : vector<16x256xf32>
    %cst_11 = arith.constant 1.000000e+00 : f32
    %20 = vector.broadcast %cst_11 : f32 to vector<16x256xf32>
    %21 = arith.addf %20, %19 : vector<16x256xf32>
    %22 = arith.divf %20, %21 : vector<16x256xf32>
    %23 = arith.truncf %22 : vector<16x256xf32> to vector<16x256xbf16>
    %c0_12 = arith.constant 0 : index
    %c0_13 = arith.constant 0 : index
    %24 = vector.load %arg6[%c0_12, %c0_13] : memref<16x256xbf16, #tpu.memory_space<vmem>>, vector<16x256xbf16>
    tpu.vector_store %arg6[%c0_12, %c0_13], %23 {strides = array<i32>} : memref<16x256xbf16, #tpu.memory_space<vmem>>, vector<16x256xbf16>,
    return
  }
  func.func @transform_0(%arg0: i32) -> (i32, i32) {
    %c0_i32 = arith.constant 0 : i32
    %c0_i32_0 = arith.constant 0 : i32
    return %arg0, %c0_i32 : i32, i32
  }
  func.func @transform_1(%arg0: i32) -> (i32, i32) {
    %c0_i32 = arith.constant 0 : i32
    %c0_i32_0 = arith.constant 0 : i32
    %c0_i32_1 = arith.constant 0 : i32
    return %c0_i32, %c0_i32_0 : i32, i32
  }
  func.func @transform_2(%arg0: i32) -> (i32, i32) {
    %c0_i32 = arith.constant 0 : i32
    %c0_i32_0 = arith.constant 0 : i32
    %c0_i32_1 = arith.constant 0 : i32
    return %c0_i32, %c0_i32_0 : i32, i32
  }
  func.func @transform_3(%arg0: i32) -> (i32, i32) {
    %c0_i32 = arith.constant 0 : i32
    %c0_i32_0 = arith.constant 0 : i32
    %c0_i32_1 = arith.constant 0 : i32
    return %c0_i32, %c0_i32_0 : i32, i32
  }
  func.func @transform_4(%arg0: i32) -> (i32, i32) {
    %c0_i32 = arith.constant 0 : i32
    %c0_i32_0 = arith.constant 0 : i32
    %c0_i32_1 = arith.constant 0 : i32
    return %c0_i32, %c0_i32_0 : i32, i32
  }
  func.func @transform_5(%arg0: i32) -> (i32, i32) {
    %c0_i32 = arith.constant 0 : i32
    %c0_i32_0 = arith.constant 0 : i32
    return %arg0, %c0_i32 : i32, i32
  }
}

</mosaic_0001>

<llo_original>
// kernel: base_autoencoder_forward.1
$region0: #{base_autoencoder_forward.1}
  #allocation0 [shape = 'u32[]', space=smem, size = 0x4, offset = 0x4, fixed_abs, tag = 'smem constant byte address 0x4 - core index']
  #allocation1 [shape = 'u32[144,128]{1,0:T(1,128)}', space=vmem, size = 0x12000, scoped, tag = 'internal scratch']
  %s0 = inlined_call_operand.vmem [shape: f32[16,256], index: 0, kind: input, shape index: {}]
  %s1 = inlined_call_operand.vmem [shape: bf16[256,128], index: 1, kind: input, shape index: {}]
  %s2 = inlined_call_operand.vmem [shape: f32[1,128], index: 2, kind: input, shape index: {}]
  %s3 = inlined_call_operand.vmem [shape: bf16[128,256], index: 3, kind: input, shape index: {}]
  %s4 = inlined_call_operand.vmem [shape: f32[1,256], index: 4, kind: input, shape index: {}]
  %s5 = inlined_call_operand.hbm [shape: bf16[16,256], index: 5, kind: output, shape index: {}]
  %s6 = sld [smem:[#allocation0]]
  $region30: #{base_autoencoder_forward.1} parent=0
    _
  %s8 = ssub.s32 1, %s6
  %s9 = scalar_select 0, %s8, %s6
  $region1: #{base_autoencoder_forward.1} parent=0
    #allocation2 [shape = 'u8[8192]{0}', space=vmem, size = 0x2000, scoped, tag = 'output window, operand 0, single buffered']
    #allocation3 [shape = 's32[1]{0}', space=sflag, size = 0x4, scoped, tag = 'scoped memory for base_autoencoder_forward.1']
    %10 = vsyncpa [#allocation3], 0
    // Predicated region
    $region2: #{base_autoencoder_forward.1} parent=1 // pred_check
      _
    $region3: #{base_autoencoder_forward.1} parent=1 // pred_check_branch
      %12 = sbr.rel (0) target = $region5
    $region4: #{base_autoencoder_forward.1} parent=1 // pred_region
      _
    $region5: #{base_autoencoder_forward.1} parent=1 // pred_fallthru
      _
    // Predicated region
    $region6: #{base_autoencoder_forward.1} parent=1 // pred_check
      _
    $region7: #{base_autoencoder_forward.1} parent=1 // pred_check_branch
      %14 = sbr.rel (0) target = $region9
    $region8: #{base_autoencoder_forward.1} parent=1 // pred_region
      _
    $region9: #{base_autoencoder_forward.1} parent=1 // pred_fallthru
      _
    // Predicated region
    $region10: #{base_autoencoder_forward.1} parent=1 // pred_check
      _
    $region11: #{base_autoencoder_forward.1} parent=1 // pred_check_branch
      %16 = sbr.rel (0) target = $region13
    $region12: #{base_autoencoder_forward.1} parent=1 // pred_region
      _
    $region13: #{base_autoencoder_forward.1} parent=1 // pred_fallthru
      _
    // Predicated region
    $region14: #{base_autoencoder_forward.1} parent=1 // pred_check
      _
    $region15: #{base_autoencoder_forward.1} parent=1 // pred_check_branch
      %18 = sbr.rel (0) target = $region17
    $region16: #{base_autoencoder_forward.1} parent=1 // pred_region
      _
    $region17: #{base_autoencoder_forward.1} parent=1 // pred_fallthru
      _
    // Predicated region
    $region18: #{base_autoencoder_forward.1} parent=1 // pred_check
      _
    $region19: #{base_autoencoder_forward.1} parent=1 // pred_check_branch
      %20 = sbr.rel (0) target = $region21
    $region20: #{base_autoencoder_forward.1} parent=1 // pred_region
      _
    $region21: #{base_autoencoder_forward.1} parent=1 // pred_fallthru
      _
    %v22 = vld [vmem:[%s0] sm:$0xff]
    %v23 = vld [vmem:[%s0 + $0x8] sm:$0xff]
    %v24 = vld [vmem:[%s0 + $0x10] sm:$0xff]
    %v25 = vld [vmem:[%s0 + $0x18] sm:$0xff]
    %v26 = vpack.c.bf16 %v24, %v22
    %v27 = vpack.c.bf16 %v25, %v23
    %v28 = vld [vmem:[%s1] sm:$0xf]
    %v29 = vld [vmem:[%s1 + $0x4] sm:$0xf]
    %v30 = vld [vmem:[%s1 + $0x8] sm:$0xf]
    %v31 = vld [vmem:[%s1 + $0xc] sm:$0xf]
    %v32 = vld [vmem:[%s1 + $0x10] sm:$0xf]
    %v33 = vld [vmem:[%s1 + $0x14] sm:$0xf]
    %v34 = vld [vmem:[%s1 + $0x18] sm:$0xf]
    %v35 = vld [vmem:[%s1 + $0x1c] sm:$0xf]
    %v36 = vld [vmem:[%s1 + $0x20] sm:$0xf]
    %v37 = vld [vmem:[%s1 + $0x24] sm:$0xf]
    %v38 = vld [vmem:[%s1 + $0x28] sm:$0xf]
    %v39 = vld [vmem:[%s1 + $0x2c] sm:$0xf]
    %v40 = vld [vmem:[%s1 + $0x30] sm:$0xf]
    %v41 = vld [vmem:[%s1 + $0x34] sm:$0xf]
    %v42 = vld [vmem:[%s1 + $0x38] sm:$0xf]
    %v43 = vld [vmem:[%s1 + $0x3c] sm:$0xf]
    %v44 = vld [vmem:[%s1 + $0x40] sm:$0xf]
    %v45 = vld [vmem:[%s1 + $0x44] sm:$0xf]
    %v46 = vld [vmem:[%s1 + $0x48] sm:$0xf]
    %v47 = vld [vmem:[%s1 + $0x4c] sm:$0xf]
    %v48 = vld [vmem:[%s1 + $0x50] sm:$0xf]
    %v49 = vld [vmem:[%s1 + $0x54] sm:$0xf]
    %v50 = vld [vmem:[%s1 + $0x58] sm:$0xf]
    %v51 = vld [vmem:[%s1 + $0x5c] sm:$0xf]
    %v52 = vld [vmem:[%s1 + $0x60] sm:$0xf]
    %v53 = vld [vmem:[%s1 + $0x64] sm:$0xf]
    %v54 = vld [vmem:[%s1 + $0x68] sm:$0xf]
    %v55 = vld [vmem:[%s1 + $0x6c] sm:$0xf]
    %v56 = vld [vmem:[%s1 + $0x70] sm:$0xf]
    %v57 = vld [vmem:[%s1 + $0x74] sm:$0xf]
    %v58 = vld [vmem:[%s1 + $0x78] sm:$0xf]
    %v59 = vld [vmem:[%s1 + $0x7c] sm:$0xf]
    %v60 = vld [vmem:[%s2] sm:$0x1]
    %v62 = vlaneseq
    %v63 = vshrl.u32 %v62, 7
    %v64 = vsub.s32 0, %v63
    %v65 = vrot.slane %v60, %v64
    %v99 = vunpack.c.l.b16 %v28
    %v100 = vunpack.c.l.b16 %v29
    %v101 = vunpack.c.l.b16 %v30
    %v102 = vunpack.c.l.b16 %v31
    %v103 = vunpack.c.l.b16 %v32
    %v104 = vunpack.c.l.b16 %v33
    %v105 = vunpack.c.l.b16 %v34
    %v106 = vunpack.c.l.b16 %v35
    %v107 = vunpack.c.l.b16 %v36
    %v108 = vunpack.c.l.b16 %v37
    %v109 = vunpack.c.l.b16 %v38
    %v110 = vunpack.c.l.b16 %v39
    %v111 = vunpack.c.l.b16 %v40
    %v112 = vunpack.c.l.b16 %v41
    %v113 = vunpack.c.l.b16 %v42
    %v114 = vunpack.c.l.b16 %v43
    %v115 = vunpack.c.l.b16 %v44
    %v116 = vunpack.c.l.b16 %v45
    %v117 = vunpack.c.l.b16 %v46
    %v118 = vunpack.c.l.b16 %v47
    %v119 = vunpack.c.l.b16 %v48
    %v120 = vunpack.c.l.b16 %v49
    %v121 = vunpack.c.l.b16 %v50
    %v122 = vunpack.c.l.b16 %v51
    %v123 = vunpack.c.l.b16 %v52
    %v124 = vunpack.c.l.b16 %v53
    %v125 = vunpack.c.l.b16 %v54
    %v126 = vunpack.c.l.b16 %v55
    %v127 = vunpack.c.l.b16 %v56
    %v128 = vunpack.c.l.b16 %v57
    %v129 = vunpack.c.l.b16 %v58
    %v130 = vunpack.c.l.b16 %v59
    %v131 = vpack.c.b16 %v100, %v99
    %v132 = vpack.c.b16 %v102, %v101
    %v133 = vpack.c.b16 %v104, %v103
    %v134 = vpack.c.b16 %v106, %v105
    %v135 = vpack.c.b16 %v108, %v107
    %v136 = vpack.c.b16 %v110, %v109
    %v137 = vpack.c.b16 %v112, %v111
    %v138 = vpack.c.b16 %v114, %v113
    %v139 = vpack.c.b16 %v116, %v115
    %v140 = vpack.c.b16 %v118, %v117
    %v141 = vpack.c.b16 %v120, %v119
    %v142 = vpack.c.b16 %v122, %v121
    %v143 = vpack.c.b16 %v124, %v123
    %v144 = vpack.c.b16 %v126, %v125
    %v145 = vpack.c.b16 %v128, %v127
    %v146 = vpack.c.b16 %v130, %v129
    %163 = vmatprep.subr.bf16.mxu0 0
    %164 = vmatpush1.bf16.msra.mxu0 %v131
    %165 = vmatprep.subr.bf16.mxu0 0
    %166 = vmatpush1.bf16.msra.mxu0 %v132
    %167 = vmatprep.subr.bf16.mxu0 0
    %168 = vmatpush1.bf16.msra.mxu0 %v133
    %169 = vmatprep.subr.bf16.mxu0 0
    %170 = vmatpush1.bf16.msra.mxu0 %v134
    %171 = vmatprep.subr.bf16.mxu0 0
    %172 = vmatpush1.bf16.msra.mxu0 %v135
    %173 = vmatprep.subr.bf16.mxu0 0
    %174 = vmatpush1.bf16.msra.mxu0 %v136
    %175 = vmatprep.subr.bf16.mxu0 0
    %176 = vmatpush1.bf16.msra.mxu0 %v137
    %177 = vmatprep.subr.bf16.mxu0 0
    %178 = vmatpush1.bf16.msra.mxu0 %v138
    %179 = vmatprep.subr.bf16.mxu0 0
    %180 = vmatpush1.bf16.msra.mxu0 %v139
    %181 = vmatprep.subr.bf16.mxu0 0
    %182 = vmatpush1.bf16.msra.mxu0 %v140
    %183 = vmatprep.subr.bf16.mxu0 0
    %184 = vmatpush1.bf16.msra.mxu0 %v141
    %185 = vmatprep.subr.bf16.mxu0 0
    %186 = vmatpush1.bf16.msra.mxu0 %v142
    %187 = vmatprep.subr.bf16.mxu0 0
    %188 = vmatpush1.bf16.msra.mxu0 %v143
    %189 = vmatprep.subr.bf16.mxu0 0
    %190 = vmatpush1.bf16.msra.mxu0 %v144
    %191 = vmatprep.subr.bf16.mxu0 0
    %192 = vmatpush1.bf16.msra.mxu0 %v145
    %193 = vmatprep.subr.bf16.mxu0 0
    %194 = vmatpush1.bf16.msra.mxu0 %v146
    %195 = vmatprep.mubr.bf16.mxu0 %v27
    %196 = vmatmul.mubr.bf16.gmra.mrb[0].mxu0 %v26
    %v197 = vpop.f32.mrb[0].mxu0
    %v198 = vadd.f32 %v65, %v197
    %v199 = vpop.f32.mrb[0].mxu0
    %v200 = vpop.f32.mrb[0].mxu0
    %v201 = vadd.f32 %v65, %v200
    %v202 = vpop.f32.mrb[0].mxu0
    %203 = vdwg.mxu0
    %v204 = vxor.u32 %v198, 2147483648
    %v205 = vxor.u32 %v201, 2147483648
    %v206 = vmul.f32 %v204, 1.442695
    %v207 = vpow.pop %v206
    %v208 = vmul.f32 %v205, 1.442695
    %v209 = vpow.pop %v208
    %v210 = vadd.f32 %v207, 1.0
    %v211 = vadd.f32 %v209, 1.0
    %v212 = vrcp.pop %v210
    %v213 = vmul.f32 1.0, %v212
    %v214 = vrcp.pop %v211
    %v215 = vmul.f32 1.0, %v214
    %v216 = vpack.c.bf16 %v215, %v213
    %v217 = vld [vmem:[%s3] sm:$0xff]
    %v218 = vld [vmem:[%s3 + $0x8] sm:$0xff]
    %v219 = vld [vmem:[%s3 + $0x10] sm:$0xff]
    %v220 = vld [vmem:[%s3 + $0x18] sm:$0xff]
    %v221 = vld [vmem:[%s3 + $0x20] sm:$0xff]
    %v222 = vld [vmem:[%s3 + $0x28] sm:$0xff]
    %v223 = vld [vmem:[%s3 + $0x30] sm:$0xff]
    %v224 = vld [vmem:[%s3 + $0x38] sm:$0xff]
    %v225 = vld [vmem:[%s3 + $0x40] sm:$0xff]
    %v226 = vld [vmem:[%s3 + $0x48] sm:$0xff]
    %v227 = vld [vmem:[%s3 + $0x50] sm:$0xff]
    %v228 = vld [vmem:[%s3 + $0x58] sm:$0xff]
    %v229 = vld [vmem:[%s3 + $0x60] sm:$0xff]
    %v230 = vld [vmem:[%s3 + $0x68] sm:$0xff]
    %v231 = vld [vmem:[%s3 + $0x70] sm:$0xff]
    %v232 = vld [vmem:[%s3 + $0x78] sm:$0xff]
    %v233 = vld [vmem:[%s4] sm:$0x3]
    %v235 = vlaneseq
    %v236 = vshrl.u32 %v235, 7
    %v237 = vsub.s32 0, %v236
    %v238 = vrot.slane %v233, %v237
    %v239 = vlaneseq
    %v240 = vshrl.u32 %v239, 7
    %v241 = vsub.s32 1, %v240
    %v242 = vrot.slane %v233, %v241
    %v261 = vunpack.c.l.b16 %v217
    %v262 = vunpack.c.h.b16 %v217
    %v263 = vunpack.c.l.b16 %v218
    %v264 = vunpack.c.h.b16 %v218
    %v265 = vunpack.c.l.b16 %v219
    %v266 = vunpack.c.h.b16 %v219
    %v267 = vunpack.c.l.b16 %v220
    %v268 = vunpack.c.h.b16 %v220
    %v269 = vunpack.c.l.b16 %v221
    %v270 = vunpack.c.h.b16 %v221
    %v271 = vunpack.c.l.b16 %v222
    %v272 = vunpack.c.h.b16 %v222
    %v273 = vunpack.c.l.b16 %v223
    %v274 = vunpack.c.h.b16 %v223
    %v275 = vunpack.c.l.b16 %v224
    %v276 = vunpack.c.h.b16 %v224
    %v277 = vunpack.c.l.b16 %v225
    %v278 = vunpack.c.h.b16 %v225
    %v279 = vunpack.c.l.b16 %v226
    %v280 = vunpack.c.h.b16 %v226
    %v281 = vunpack.c.l.b16 %v227
    %v282 = vunpack.c.h.b16 %v227
    %v283 = vunpack.c.l.b16 %v228
    %v284 = vunpack.c.h.b16 %v228
    %v285 = vunpack.c.l.b16 %v229
    %v286 = vunpack.c.h.b16 %v229
    %v287 = vunpack.c.l.b16 %v230
    %v288 = vunpack.c.h.b16 %v230
    %v289 = vunpack.c.l.b16 %v231
    %v290 = vunpack.c.h.b16 %v231
    %v291 = vunpack.c.l.b16 %v232
    %v292 = vunpack.c.h.b16 %v232
    %v293 = vpack.c.b16 %v263, %v261
    %v294 = vpack.c.b16 %v264, %v262
    %v295 = vpack.c.b16 %v267, %v265
    %v296 = vpack.c.b16 %v268, %v266
    %v297 = vpack.c.b16 %v271, %v269
    %v298 = vpack.c.b16 %v272, %v270
    %v299 = vpack.c.b16 %v275, %v273
    %v300 = vpack.c.b16 %v276, %v274
    %v301 = vpack.c.b16 %v279, %v277
    %v302 = vpack.c.b16 %v280, %v278
    %v303 = vpack.c.b16 %v283, %v281
    %v304 = vpack.c.b16 %v284, %v282
    %v305 = vpack.c.b16 %v287, %v285
    %v306 = vpack.c.b16 %v288, %v286
    %v307 = vpack.c.b16 %v291, %v289
    %v308 = vpack.c.b16 %v292, %v290
    %325 = vmatprep.subr.bf16.mxu0 %v294
    %326 = vmatpush1.bf16.msra.mxu0 %v293
    %327 = vmatprep.subr.bf16.mxu0 %v296
    %328 = vmatpush1.bf16.msra.mxu0 %v295
    %329 = vmatprep.subr.bf16.mxu0 %v298
    %330 = vmatpush1.bf16.msra.mxu0 %v297
    %331 = vmatprep.subr.bf16.mxu0 %v300
    %332 = vmatpush1.bf16.msra.mxu0 %v299
    %333 = vmatprep.subr.bf16.mxu0 %v302
    %334 = vmatpush1.bf16.msra.mxu0 %v301
    %335 = vmatprep.subr.bf16.mxu0 %v304
    %336 = vmatpush1.bf16.msra.mxu0 %v303
    %337 = vmatprep.subr.bf16.mxu0 %v306
    %338 = vmatpush1.bf16.msra.mxu0 %v305
    %339 = vmatprep.subr.bf16.mxu0 %v308
    %340 = vmatpush1.bf16.msra.mxu0 %v307
    %341 = vmatprep.subr.bf16.mxu0 0
    %342 = vmatpush1.bf16.msra.mxu0 0
    %343 = vmatprep.subr.bf16.mxu0 0
    %344 = vmatpush1.bf16.msra.mxu0 0
    %345 = vmatprep.subr.bf16.mxu0 0
    %346 = vmatpush1.bf16.msra.mxu0 0
    %347 = vmatprep.subr.bf16.mxu0 0
    %348 = vmatpush1.bf16.msra.mxu0 0
    %349 = vmatprep.subr.bf16.mxu0 0
    %350 = vmatpush1.bf16.msra.mxu0 0
    %351 = vmatprep.subr.bf16.mxu0 0
    %352 = vmatpush1.bf16.msra.mxu0 0
    %353 = vmatprep.subr.bf16.mxu0 0
    %354 = vmatpush1.bf16.msra.mxu0 0
    %355 = vmatprep.subr.bf16.mxu0 0
    %356 = vmatpush1.bf16.msra.mxu0 0
    %357 = vmatprep.mubr.bf16.mxu0 0
    %358 = vmatmul.mubr.bf16.gmra.mrb[0].mxu0 %v216
    %v359 = vpop.f32.mrb[0].mxu0
    %v360 = vadd.f32 %v238, %v359
    %v361 = vpop.f32.mrb[0].mxu0
    %v362 = vadd.f32 %v242, %v361
    %v363 = vpop.f32.mrb[0].mxu0
    %v364 = vadd.f32 %v238, %v363
    %v365 = vpop.f32.mrb[0].mxu0
    %v366 = vadd.f32 %v242, %v365
    %367 = vdwg.mxu0
    %v368 = vxor.u32 %v360, 2147483648
    %v369 = vxor.u32 %v362, 2147483648
    %v370 = vxor.u32 %v364, 2147483648
    %v371 = vxor.u32 %v366, 2147483648
    %v372 = vmul.f32 %v368, 1.442695
    %v373 = vpow.pop %v372
    %v374 = vmul.f32 %v369, 1.442695
    %v375 = vpow.pop %v374
    %v376 = vmul.f32 %v370, 1.442695
    %v377 = vpow.pop %v376
    %v378 = vmul.f32 %v371, 1.442695
    %v379 = vpow.pop %v378
    %v380 = vadd.f32 %v373, 1.0
    %v381 = vadd.f32 %v375, 1.0
    %v382 = vadd.f32 %v377, 1.0
    %v383 = vadd.f32 %v379, 1.0
    %v384 = vrcp.pop %v380
    %v385 = vmul.f32 1.0, %v384
    %v386 = vrcp.pop %v381
    %v387 = vmul.f32 1.0, %v386
    %v388 = vrcp.pop %v382
    %v389 = vmul.f32 1.0, %v388
    %v390 = vrcp.pop %v383
    %v391 = vmul.f32 1.0, %v390
    %v392 = vpack.c.bf16 %v389, %v385
    %v393 = vpack.c.bf16 %v391, %v387
    %v396 = vunpack.c.l.b16 %v392
    %v397 = vunpack.c.l.b16 %v393
    %v398 = vunpack.c.h.b16 %v392
    %v399 = vunpack.c.h.b16 %v393
    %v400 = vpack.c.b16 %v397, %v396
    %v401 = vpack.c.b16 %v399, %v398
    %404 = vst [vmem:[#allocation2] sm:$0xff] %v400
    %405 = vst [vmem:[#allocation2 + $0x8] sm:$0xff] %v401
    // Predicated region
    $region22: #{base_autoencoder_forward.1} parent=1 // pred_check
      _
    $region23: #{base_autoencoder_forward.1} parent=1 // pred_check_branch
      %407 = sbr.rel (0) target = $region25
    $region24: #{base_autoencoder_forward.1} parent=1 // pred_region
      %s409 = ssub.s32 256, 256
      %410 = vsyncadd [#allocation3], %s409
      %s411 = sshll.u32 [#allocation2], 4
      %s412 = int_to_ptr.vmem [resolvable:$true] %s411
      %417 = dma.vmem_to_hbm [thread:$0]  %s412, 256, %s5, [#allocation3], 128, 128, 8
    $region25: #{base_autoencoder_forward.1} parent=1 // pred_fallthru
      _
    // Predicated region
    $region26: #{base_autoencoder_forward.1} parent=1 // pred_check
      _
    $region27: #{base_autoencoder_forward.1} parent=1 // pred_check_branch
      %419 = sbr.rel (0) target = $region29
    $region28: #{base_autoencoder_forward.1} parent=1 // pred_region
      %420 = dma.done [#allocation3], 256
    $region29: #{base_autoencoder_forward.1} parent=1 // pred_fallthru
      _
    %421 = vsyncpa [#allocation3], 1

</llo_original>
